<compile_context>
chip_gen: v6e
topology: v6e:2x2x1
jax: 0.10.0
libtpu: 0.0.40
codegen_flags: <defaults>
</compile_context>

<pallas_src>
import jax
import jax.numpy as jnp
from jax.experimental import pallas as pl
from jax.experimental.pallas import tpu as pltpu

# The 17 per-keypoint thresholds from the module's __init__.
_THRESHOLD = jnp.array(
    [0.0085, 0.00831, 0.0083, 0.00743, 0.00737, 0.00742, 0.00748, 0.01097,
     0.01103, 0.01414, 0.01356, 0.01126, 0.01127, 0.01616, 0.01663, 0.00533,
     0.00565],
    dtype=jnp.float32,
)

_TB = 4096                 # lane-axis (batch) tile; multiple of 128
_FAST_PATH_ELEMS = 4096    # below this many B*K elements, fused XLA wins outright


def _loss_kpts2d_ref(pred_kpt, target_kpt):
    """Pure-JAX reference mirroring the PyTorch forward (also the small-B path)."""
    target2d = target_kpt[..., :2].astype(jnp.float32)
    err = jnp.sum(jnp.abs(pred_kpt.astype(jnp.float32) - target2d), axis=-1)
    thr = _THRESHOLD[None, : err.shape[1]]
    return jnp.mean(jnp.where(err > thr, err, err * 0.001))


def _make_kernel(*, tb, steps, nblocks, true_b, inv_n):
    """Kernel closure.  tb/steps/nblocks/true_b/inv_n are static Python values."""

    def kernel(pred_ref, tgt_ref, thr_ref, out_ref, acc_ref):
        # pred_ref / tgt_ref: (2, K, tb) — plane 0 = x, plane 1 = y; batch on lanes
        # thr_ref: (K, 1); out_ref: (1, 8, 128) per-core row; acc_ref: (K, tb) f32
        c = pl.program_id(0)          # core / parallel axis
        i = pl.program_id(1)          # batch-reduction axis (per core)

        @pl.when(i == 0)
        def _init():
            acc_ref[...] = jnp.zeros_like(acc_ref)

        px = pred_ref[0].astype(jnp.float32)               # (K, tb)
        py = pred_ref[1].astype(jnp.float32)
        tx = tgt_ref[0].astype(jnp.float32)
        ty = tgt_ref[1].astype(jnp.float32)

        err = jnp.abs(px - tx) + jnp.abs(py - ty)          # L1 over xy -> (K, tb)
        thr = thr_ref[...].astype(jnp.float32)             # (K, 1) lane-broadcast
        loss = jnp.where(err > thr, err, err * 0.001)      # single select, no mask mul

        # Tail / overhang masking against the TRUE batch size.  `blk` is the
        # LOGICAL (unclamped) block index; blocks past the array end are
        # re-pointed at the last valid block by the index_map and fully zeroed
        # here, so undefined OOB VMEM contents never reach the accumulator.
        blk = c * steps + i
        col = jax.lax.broadcasted_iota(jnp.int32, err.shape, 1) + blk * tb
        loss = jnp.where(col < true_b, loss, 0.0)

        acc_ref[...] += loss                               # pure VPU add per step

        @pl.when(i == steps - 1)
        def _fin():
            total = jnp.sum(acc_ref[...]) * inv_n          # one reduce + one mul / core
            out_ref[...] = jnp.broadcast_to(total, out_ref.shape)

    return kernel


def loss_kpts2d(pred_kpt, target_kpt):
    """pred_kpt: (B, K, 2); target_kpt: (B, K, 3) -> scalar f32 loss."""
    B, K, c2 = pred_kpt.shape
    assert c2 == 2 and target_kpt.shape == (B, K, 3)
    assert K == _THRESHOLD.shape[0], "threshold table is defined for 17 keypoints"

    # TODO(synk): the confidence-weighted L1 term in the PyTorch forward is
    # overwritten (dead code) and is intentionally not implemented.

    if B * K <= _FAST_PATH_ELEMS:
        # Tiny inputs (the production B=2 case): a pallas_call launch + DMA
        # setup is pure fixed overhead; XLA's fused elementwise path wins.
        return _loss_kpts2d_ref(pred_kpt, target_kpt)

    # Planar "coordinate plane" layout with BATCH on the 128-lane axis:
    # (coord, K, B).  The [..., :2] slice fuses into this one transpose.
    # TODO(synk): ideally the producer emits this layout (or XLA fuses the
    # transpose upstream); as written it is one extra HBM pass per input.
    pred_p = jnp.transpose(pred_kpt, (2, 1, 0))              # (2, K, B)
    tgt_p = jnp.transpose(target_kpt[..., :2], (2, 1, 0))    # (2, K, B)
    thr = _THRESHOLD.reshape(K, 1)

    tb = B if B <= _TB else _TB        # full-dim block (exact) or 128-aligned tile
    nblocks = pl.cdiv(B, tb)
    nc = 2 if nblocks >= 2 else 1      # shard batch range across TCs (v7x); harmless on 1-TC chips
    steps = pl.cdiv(nblocks, nc)
    inv_n = 1.0 / float(B * K)         # TRUE element count, independent of tiling/masking

    kernel = _make_kernel(tb=tb, steps=steps, nblocks=nblocks, true_b=B, inv_n=inv_n)

    def xy_map(c, i):
        # Clamp so any overhang block (nc*steps*tb > B region) re-reads the
        # last valid block instead of a fully-OOB one; the kernel masks it to 0.
        return (0, 0, jnp.minimum(c * steps + i, nblocks - 1))

    out = pl.pallas_call(
        kernel,
        out_shape=jax.ShapeDtypeStruct((nc, 8, 128), jnp.float32),
        grid_spec=pltpu.PrefetchScalarGridSpec(
            num_scalar_prefetch=0,
            grid=(nc, steps),
            in_specs=[
                pl.BlockSpec((2, K, tb), xy_map),              # pred xy planes
                pl.BlockSpec((2, K, tb), xy_map),              # target xy planes
                pl.BlockSpec((K, 1), lambda c, i: (0, 0)),     # thresholds (resident)
            ],
            out_specs=pl.BlockSpec((1, 8, 128), lambda c, i: (c, 0, 0)),
            scratch_shapes=[pltpu.VMEM((K, tb), jnp.float32)], # per-core accumulator
        ),
        compiler_params=pltpu.CompilerParams(
            dimension_semantics=("parallel", "arbitrary"),     # core axis / reduction axis
        ),
    )(pred_p, tgt_p, thr)

    return jnp.sum(out[:, 0, 0])       # sum the per-core partial means


if __name__ == "__main__":
    key = jax.random.PRNGKey(0)
    ks = jax.random.split(key, 6)
    K = 17

    def make_inputs(kp, kt, B, scale):
        pred = jax.random.normal(kp, (B, K, 2), dtype=jnp.float32) * scale
        tgt_xy = jax.random.normal(kt, (B, K, 2), dtype=jnp.float32) * scale
        conf = jnp.ones((B, K, 1), dtype=jnp.float32)
        return pred, jnp.concatenate([tgt_xy, conf], axis=-1)

    # 1) Production-like tiny shape: 17 keypoints, batch 2 (fast path).
    pred, tgt = make_inputs(ks[0], ks[1], 2, 0.02)
    out = loss_kpts2d(pred, tgt)
    jax.block_until_ready(out)
    ref = _loss_kpts2d_ref(pred, tgt)
    assert jnp.allclose(out, ref, rtol=1e-5, atol=1e-6), (out, ref)

    # 2) Single full-dim block Pallas path, B not a multiple of 8 or 128.
    pred, tgt = make_inputs(ks[2], ks[3], 777, 0.05)
    out = loss_kpts2d(pred, tgt)
    jax.block_until_ready(out)
    ref = _loss_kpts2d_ref(pred, tgt)
    assert jnp.allclose(out, ref, rtol=1e-4, atol=1e-6), (out, ref)

    # 3) Multi-block + dual-core split + partial-tail and overhang-block masking.
    pred, tgt = make_inputs(ks[4], ks[5], 8200, 0.05)
    out = loss_kpts2d(pred, tgt)
    jax.block_until_ready(out)
    ref = _loss_kpts2d_ref(pred, tgt)
    assert jnp.allclose(out, ref, rtol=1e-4, atol=1e-6), (out, ref)

    print("KERNEL_OK")
</pallas_src>

<mosaic_0001>
module attributes {stable_mosaic.version = 11 : i64} {
  func.func @kernel(%arg0: i32, %arg1: i32, %arg2: memref<2x17x777xf32, #tpu.memory_space<vmem>>, %arg3: memref<2x17x777xf32, #tpu.memory_space<vmem>>, %arg4: memref<17x1xf32, #tpu.memory_space<vmem>>, %arg5: memref<1x8x128xf32, #tpu.memory_space<vmem>>, %arg6: memref<17x777xf32, #tpu.memory_space<vmem>>) attributes {dimension_semantics = [#tpu.dimension_semantics<parallel>, #tpu.dimension_semantics<arbitrary>], iteration_bounds = array<i64: 1, 1>, scalar_prefetch = 0 : i64, scratch_operands = 1 : i64, tpu.core_type = #tpu.core_type<tc>, window_params = [{transform_indices = @transform_0, window_bounds = array<i64: 2, 17, 777>}, {transform_indices = @transform_1, window_bounds = array<i64: 2, 17, 777>}, {pipeline_mode = #tpu.pipeline_mode<synchronous>, transform_indices = @transform_2, window_bounds = array<i64: 17, 1>}, {transform_indices = @transform_3, window_bounds = array<i64: 1, 8, 128>}]} {
    %c0_i32 = arith.constant 0 : i32
    %0 = arith.cmpi eq, %arg1, %c0_i32 : i32
    %1 = arith.extui %0 : i1 to i32
    %c0_i32_0 = arith.constant 0 : i32
    %2 = arith.cmpi ne, %1, %c0_i32_0 : i32
    scf.if %2 {
      %cst_21 = arith.constant 0.000000e+00 : f32
      %38 = vector.broadcast %cst_21 : f32 to vector<17x777xf32>
      %c0_22 = arith.constant 0 : index
      %c0_23 = arith.constant 0 : index
      %39 = vector.load %arg6[%c0_22, %c0_23] : memref<17x777xf32, #tpu.memory_space<vmem>>, vector<17x777xf32>
      tpu.vector_store %arg6[%c0_22, %c0_23], %38 {strides = array<i32>} : memref<17x777xf32, #tpu.memory_space<vmem>>, vector<17x777xf32>,
    } else {
    }
    %c0 = arith.constant 0 : index
    %c0_1 = arith.constant 0 : index
    %c0_2 = arith.constant 0 : index
    %3 = vector.load %arg2[%c0, %c0_1, %c0_2] : memref<2x17x777xf32, #tpu.memory_space<vmem>>, vector<1x17x777xf32>
    %4 = vector.shape_cast %3 : vector<1x17x777xf32> to vector<17x777xf32>
    %c1 = arith.constant 1 : index
    %c0_3 = arith.constant 0 : index
    %c0_4 = arith.constant 0 : index
    %5 = vector.load %arg2[%c1, %c0_3, %c0_4] : memref<2x17x777xf32, #tpu.memory_space<vmem>>, vector<1x17x777xf32>
    %6 = vector.shape_cast %5 : vector<1x17x777xf32> to vector<17x777xf32>
    %c0_5 = arith.constant 0 : index
    %c0_6 = arith.constant 0 : index
    %c0_7 = arith.constant 0 : index
    %7 = vector.load %arg3[%c0_5, %c0_6, %c0_7] : memref<2x17x777xf32, #tpu.memory_space<vmem>>, vector<1x17x777xf32>
    %8 = vector.shape_cast %7 : vector<1x17x777xf32> to vector<17x777xf32>
    %c1_8 = arith.constant 1 : index
    %c0_9 = arith.constant 0 : index
    %c0_10 = arith.constant 0 : index
    %9 = vector.load %arg3[%c1_8, %c0_9, %c0_10] : memref<2x17x777xf32, #tpu.memory_space<vmem>>, vector<1x17x777xf32>
    %10 = vector.shape_cast %9 : vector<1x17x777xf32> to vector<17x777xf32>
    %11 = arith.subf %4, %8 : vector<17x777xf32>
    %12 = math.absf %11 : vector<17x777xf32>
    %13 = arith.subf %6, %10 : vector<17x777xf32>
    %14 = math.absf %13 : vector<17x777xf32>
    %15 = arith.addf %12, %14 : vector<17x777xf32>
    %c0_11 = arith.constant 0 : index
    %c0_12 = arith.constant 0 : index
    %16 = vector.load %arg4[%c0_11, %c0_12] : memref<17x1xf32, #tpu.memory_space<vmem>>, vector<17x1xf32>
    %17 = vector.broadcast %16 : vector<17x1xf32> to vector<17x777xf32>
    %18 = arith.cmpf ogt, %15, %17 : vector<17x777xf32>
    %cst = arith.constant 1.000000e-03 : f32
    %19 = vector.broadcast %cst : f32 to vector<17x777xf32>
    %20 = arith.mulf %15, %19 : vector<17x777xf32>
    %21 = arith.select %18, %15, %20 : vector<17x777xi1>, vector<17x777xf32>
    %c1_i32 = arith.constant 1 : i32
    %22 = arith.muli %arg0, %c1_i32 : i32
    %23 = arith.addi %22, %arg1 : i32
    %24 = tpu.iota {dimensions = array<i32: 1>} : vector<17x777xi32>
    %c777_i32 = arith.constant 777 : i32
    %25 = arith.muli %23, %c777_i32 : i32
    %26 = vector.broadcast %25 : i32 to vector<17x777xi32>
    %27 = arith.addi %24, %26 : vector<17x777xi32>
    %c777_i32_13 = arith.constant 777 : i32
    %28 = vector.broadcast %c777_i32_13 : i32 to vector<17x777xi32>
    %29 = arith.cmpi slt, %27, %28 : vector<17x777xi32>
    %cst_14 = arith.constant 0.000000e+00 : f32
    %30 = vector.broadcast %cst_14 : f32 to vector<17x777xf32>
    %31 = arith.select %29, %21, %30 : vector<17x777xi1>, vector<17x777xf32>
    %c0_15 = arith.constant 0 : index
    %c0_16 = arith.constant 0 : index
    %32 = vector.load %arg6[%c0_15, %c0_16] : memref<17x777xf32, #tpu.memory_space<vmem>>, vector<17x777xf32>
    %33 = arith.addf %32, %31 : vector<17x777xf32>
    %c0_17 = arith.constant 0 : index
    %c0_18 = arith.constant 0 : index
    %34 = vector.load %arg6[%c0_17, %c0_18] : memref<17x777xf32, #tpu.memory_space<vmem>>, vector<17x777xf32>
    tpu.vector_store %arg6[%c0_17, %c0_18], %33 {strides = array<i32>} : memref<17x777xf32, #tpu.memory_space<vmem>>, vector<17x777xf32>,
    %c0_i32_19 = arith.constant 0 : i32
    %35 = arith.cmpi eq, %arg1, %c0_i32_19 : i32
    %36 = arith.extui %35 : i1 to i32
    %c0_i32_20 = arith.constant 0 : i32
    %37 = arith.cmpi ne, %36, %c0_i32_20 : i32
    scf.if %37 {
      %c0_21 = arith.constant 0 : index
      %c0_22 = arith.constant 0 : index
      %38 = vector.load %arg6[%c0_21, %c0_22] : memref<17x777xf32, #tpu.memory_space<vmem>>, vector<17x777xf32>
      %39 = vector.shape_cast %38 : vector<17x777xf32> to vector<1x17x777xf32>
      %cst_23 = arith.constant dense<0.000000e+00> : vector<1xf32>
      %40 = vector.multi_reduction <add>, %39, %cst_23 [1, 2] : vector<1x17x777xf32> to vector<1xf32>
      %41 = vector.shape_cast %40 : vector<1xf32> to vector<1x1x1xf32>
      %42 = vector.extract %41[0, 0, 0] : f32 from vector<1x1x1xf32>
      %cst_24 = arith.constant 7.57059606E-5 : f32
      %43 = arith.mulf %42, %cst_24 : f32
      %44 = vector.broadcast %43 : f32 to vector<1x8x128xf32>
      %c0_25 = arith.constant 0 : index
      %c0_26 = arith.constant 0 : index
      %c0_27 = arith.constant 0 : index
      %45 = vector.load %arg5[%c0_25, %c0_26, %c0_27] : memref<1x8x128xf32, #tpu.memory_space<vmem>>, vector<1x8x128xf32>
      tpu.vector_store %arg5[%c0_25, %c0_26, %c0_27], %44 {strides = array<i32>} : memref<1x8x128xf32, #tpu.memory_space<vmem>>, vector<1x8x128xf32>,
    } else {
    }
    return
  }
  func.func @transform_0(%arg0: i32, %arg1: i32) -> (i32, i32, i32) {
    %c1_i32 = arith.constant 1 : i32
    %0 = arith.muli %arg0, %c1_i32 : i32
    %1 = arith.addi %0, %arg1 : i32
    %c0_i32 = arith.constant 0 : i32
    %2 = arith.minsi %1, %c0_i32 : i32
    %c0_i32_0 = arith.constant 0 : i32
    %c0_i32_1 = arith.constant 0 : i32
    %c0_i32_2 = arith.constant 0 : i32
    return %c0_i32_0, %c0_i32_1, %2 : i32, i32, i32
  }
  func.func @transform_1(%arg0: i32, %arg1: i32) -> (i32, i32, i32) {
    %c1_i32 = arith.constant 1 : i32
    %0 = arith.muli %arg0, %c1_i32 : i32
    %1 = arith.addi %0, %arg1 : i32
    %c0_i32 = arith.constant 0 : i32
    %2 = arith.minsi %1, %c0_i32 : i32
    %c0_i32_0 = arith.constant 0 : i32
    %c0_i32_1 = arith.constant 0 : i32
    %c0_i32_2 = arith.constant 0 : i32
    return %c0_i32_0, %c0_i32_1, %2 : i32, i32, i32
  }
  func.func @transform_2(%arg0: i32, %arg1: i32) -> (i32, i32) {
    %c0_i32 = arith.constant 0 : i32
    %c0_i32_0 = arith.constant 0 : i32
    %c0_i32_1 = arith.constant 0 : i32
    return %c0_i32, %c0_i32_0 : i32, i32
  }
  func.func @transform_3(%arg0: i32, %arg1: i32) -> (i32, i32, i32) {
    %c0_i32 = arith.constant 0 : i32
    %c0_i32_0 = arith.constant 0 : i32
    %c0_i32_1 = arith.constant 0 : i32
    return %arg0, %c0_i32, %c0_i32_0 : i32, i32, i32
  }
}

</mosaic_0001>

<llo_original>
// kernel: tpu_custom_call.1
$region0: #{tpu_custom_call.1}
  #allocation0 [shape = 'u32[]', space=smem, size = 0x4, offset = 0x4, fixed_abs, tag = 'smem constant byte address 0x4 - core index']
  #allocation1 [shape = 'u32[144,128]{1,0:T(1,128)}', space=vmem, size = 0x12000, scoped, tag = 'internal scratch']
  #allocation2 [shape = 'f32[17,777]{1,0:T(8,128)}', space=vmem, size = 0x15000, scoped, tag = 'scratch operand']
  %s0 = inlined_call_operand.vmem [shape: f32[2,17,777], index: 0, kind: input, shape index: {}]
  %s1 = inlined_call_operand.vmem [shape: f32[2,17,777], index: 1, kind: input, shape index: {}]
  %s2 = inlined_call_operand.vmem [shape: f32[17,1], index: 2, kind: input, shape index: {}]
  %s3 = inlined_call_operand.hbm [shape: f32[1,8,128], index: 3, kind: output, shape index: {}]
  %s4 = sld [smem:[#allocation0]]
  $region30: #{tpu_custom_call.1} parent=0
    _
  %s6 = ssub.s32 1, %s4
  %s7 = scalar_select 0, %s6, %s4
  $region1: #{tpu_custom_call.1} parent=0
    #allocation3 [shape = 'u8[4096]{0}', space=vmem, size = 0x1000, scoped, tag = 'output window, operand 0, single buffered']
    #allocation4 [shape = 's32[1]{0}', space=sflag, size = 0x4, scoped, tag = 'scoped memory for tpu_custom_call.1']
    %8 = vsyncpa [#allocation4], 0
    // Predicated region
    $region2: #{tpu_custom_call.1} parent=1 // pred_check
      _
    $region3: #{tpu_custom_call.1} parent=1 // pred_check_branch
      %10 = sbr.rel (0) target = $region5
    $region4: #{tpu_custom_call.1} parent=1 // pred_region
      %s11 = sadd.s32 0, 0
      %p12 = scmp.lt.s32.totalorder %s11, 0
      %s13 = scalar_select %p12, %s11, 0
      %s14 = smul.u32 7, %s13
      %p15 = scmp.lt.s32.totalorder %s14, 6
      %s16 = scalar_select %p15, %s14, 6
      %s17 = smul.addr %s16, 8
      %s18 = scalar_lea.vmem %s0, %s17
      %s19 = sadd.s32 0, 0
      %p20 = scmp.lt.s32.totalorder %s19, 0
      %s21 = scalar_select %p20, %s19, 0
      %s22 = smul.u32 7, %s21
    $region5: #{tpu_custom_call.1} parent=1 // pred_fallthru
      _
    // Predicated region
    $region6: #{tpu_custom_call.1} parent=1 // pred_check
      _
    $region7: #{tpu_custom_call.1} parent=1 // pred_check_branch
      %24 = sbr.rel (0) target = $region9
    $region8: #{tpu_custom_call.1} parent=1 // pred_region
      %s25 = sadd.s32 0, 0
      %p26 = scmp.lt.s32.totalorder %s25, 0
      %s27 = scalar_select %p26, %s25, 0
      %s28 = smul.u32 7, %s27
      %p29 = scmp.lt.s32.totalorder %s28, 6
      %s30 = scalar_select %p29, %s28, 6
      %s31 = smul.addr %s30, 8
      %s32 = scalar_lea.vmem %s1, %s31
      %s33 = sadd.s32 0, 0
      %p34 = scmp.lt.s32.totalorder %s33, 0
      %s35 = scalar_select %p34, %s33, 0
      %s36 = smul.u32 7, %s35
    $region9: #{tpu_custom_call.1} parent=1 // pred_fallthru
      _
    // Predicated region
    $region10: #{tpu_custom_call.1} parent=1 // pred_check
      _
    $region11: #{tpu_custom_call.1} parent=1 // pred_check_branch
      %38 = sbr.rel (0) target = $region13
    $region12: #{tpu_custom_call.1} parent=1 // pred_region
      _
    $region13: #{tpu_custom_call.1} parent=1 // pred_fallthru
      _
    %s39 = sadd.s32 0, 0
    %p40 = scmp.lt.s32.totalorder %s39, 0
    %s41 = scalar_select %p40, %s39, 0
    %s42 = smul.u32 7, %s41
    %p43 = scmp.lt.s32.totalorder %s42, 6
    %s44 = scalar_select %p43, %s42, 6
    %s45 = smul.addr %s44, 8
    %s46 = scalar_lea.vmem %s0, %s45
    %s47 = sadd.s32 0, 0
    %p48 = scmp.lt.s32.totalorder %s47, 0
    %s49 = scalar_select %p48, %s47, 0
    %s50 = smul.u32 7, %s49
    %p51 = scmp.lt.s32.totalorder %s50, 6
    %s52 = scalar_select %p51, %s50, 6
    %s53 = smul.addr %s52, 8
    %s54 = scalar_lea.vmem %s1, %s53
    %s55 = sadd.s32 0, 0
    %p56 = scmp.lt.s32.totalorder %s55, 0
    %s57 = scalar_select %p56, %s55, 0
    %s58 = smul.u32 7, %s57
    %p59 = scmp.lt.s32.totalorder %s58, 6
    %s60 = scalar_select %p59, %s58, 6
    %s61 = smul.addr %s60, 8
    %s62 = scalar_lea.vmem %s0, %s61
    %s63 = sadd.s32 0, 0
    %p64 = scmp.lt.s32.totalorder %s63, 0
    %s65 = scalar_select %p64, %s63, 0
    %s66 = smul.u32 7, %s65
    %s67 = sadd.s32 0, 0
    %p68 = scmp.lt.s32.totalorder %s67, 0
    %s69 = scalar_select %p68, %s67, 0
    %s70 = smul.u32 7, %s69
    %p71 = scmp.lt.s32.totalorder %s70, 6
    %s72 = scalar_select %p71, %s70, 6
    %s73 = smul.addr %s72, 8
    %s74 = scalar_lea.vmem %s1, %s73
    %s75 = sadd.s32 0, 0
    %p76 = scmp.lt.s32.totalorder %s75, 0
    %s77 = scalar_select %p76, %s75, 0
    %s78 = smul.u32 7, %s77
    %p79 = scmp.eq.s32.totalorder 0, 0
    // Predicated region
    $region14: #{tpu_custom_call.1} parent=1 // pred_check
      %p80 = pneg %p79
    $region15: #{tpu_custom_call.1} parent=1 // pred_check_branch
      %82 = sbr.rel (%p80) target = $region17
    $region16: #{tpu_custom_call.1} parent=1 // pred_region
      %83 = vst [vmem:[#allocation2] sm:$0xff] 0.0
      %84 = vst [vmem:[#allocation2 + $0x8] sm:$0xff] 0.0
      %85 = vst [vmem:[#allocation2 + $0x10] sm:$0xff] 0.0
      %86 = vst [vmem:[#allocation2 + $0x18] sm:$0xff] 0.0
      %87 = vst [vmem:[#allocation2 + $0x20] sm:$0xff] 0.0
      %88 = vst [vmem:[#allocation2 + $0x28] sm:$0xff] 0.0
      %vm89 = vcmask 72704
      %90 = vst.msk [vmem:[#allocation2 + $0x30] sm:$0xff] %vm89, 0.0
      %91 = vst [vmem:[#allocation2 + $0x38] sm:$0xff] 0.0
      %92 = vst [vmem:[#allocation2 + $0x40] sm:$0xff] 0.0
      %93 = vst [vmem:[#allocation2 + $0x48] sm:$0xff] 0.0
      %94 = vst [vmem:[#allocation2 + $0x50] sm:$0xff] 0.0
      %95 = vst [vmem:[#allocation2 + $0x58] sm:$0xff] 0.0
      %96 = vst [vmem:[#allocation2 + $0x60] sm:$0xff] 0.0
      %97 = vst.msk [vmem:[#allocation2 + $0x68] sm:$0xff] %vm89, 0.0
      %98 = vst [vmem:[#allocation2 + $0x70] sm:$0x1] 0.0
      %99 = vst [vmem:[#allocation2 + $0x78] sm:$0x1] 0.0
      %100 = vst [vmem:[#allocation2 + $0x80] sm:$0x1] 0.0
      %101 = vst [vmem:[#allocation2 + $0x88] sm:$0x1] 0.0
      %102 = vst [vmem:[#allocation2 + $0x90] sm:$0x1] 0.0
      %103 = vst [vmem:[#allocation2 + $0x98] sm:$0x1] 0.0
      %vm104 = vcmask 65536
      %105 = vst.msk [vmem:[#allocation2 + $0xa0] sm:$0x1] %vm104, 0.0
    $region17: #{tpu_custom_call.1} parent=1 // pred_fallthru
      _
    %v106 = vld [vmem:[%s62] sm:$0xff]
    %v107 = vld [vmem:[%s62 + $0x8] sm:$0xff]
    %v108 = vld [vmem:[%s62 + $0x10] sm:$0xff]
    %v109 = vld [vmem:[%s62 + $0x18] sm:$0xff]
    %v110 = vld [vmem:[%s62 + $0x20] sm:$0xff]
    %v111 = vld [vmem:[%s62 + $0x28] sm:$0xff]
    %v112 = vld [vmem:[%s62 + $0x30] sm:$0xff]
    %v113 = vld [vmem:[%s62 + $0x38] sm:$0xff]
    %v114 = vld [vmem:[%s62 + $0x40] sm:$0xff]
    %v115 = vld [vmem:[%s62 + $0x48] sm:$0xff]
    %v116 = vld [vmem:[%s62 + $0x50] sm:$0xff]
    %v117 = vld [vmem:[%s62 + $0x58] sm:$0xff]
    %v118 = vld [vmem:[%s62 + $0x60] sm:$0xff]
    %v119 = vld [vmem:[%s62 + $0x68] sm:$0xff]
    %v120 = vld [vmem:[%s62 + $0x70] sm:$0x1]
    %v121 = vld [vmem:[%s62 + $0x78] sm:$0x1]
    %v122 = vld [vmem:[%s62 + $0x80] sm:$0x1]
    %v123 = vld [vmem:[%s62 + $0x88] sm:$0x1]
    %v124 = vld [vmem:[%s62 + $0x90] sm:$0x1]
    %v125 = vld [vmem:[%s62 + $0x98] sm:$0x1]
    %v126 = vld [vmem:[%s62 + $0xa0] sm:$0x1]
    %s127 = scalar_lea.vmem %s62, 168
    %v128 = vld [vmem:[%s127] sm:$0xff]
    %v129 = vld [vmem:[%s127 + $0x8] sm:$0xff]
    %v130 = vld [vmem:[%s127 + $0x10] sm:$0xff]
    %v131 = vld [vmem:[%s127 + $0x18] sm:$0xff]
    %v132 = vld [vmem:[%s127 + $0x20] sm:$0xff]
    %v133 = vld [vmem:[%s127 + $0x28] sm:$0xff]
    %v134 = vld [vmem:[%s127 + $0x30] sm:$0xff]
    %v135 = vld [vmem:[%s127 + $0x38] sm:$0xff]
    %v136 = vld [vmem:[%s127 + $0x40] sm:$0xff]
    %v137 = vld [vmem:[%s127 + $0x48] sm:$0xff]
    %v138 = vld [vmem:[%s127 + $0x50] sm:$0xff]
    %v139 = vld [vmem:[%s127 + $0x58] sm:$0xff]
    %v140 = vld [vmem:[%s127 + $0x60] sm:$0xff]
    %v141 = vld [vmem:[%s127 + $0x68] sm:$0xff]
    %v142 = vld [vmem:[%s127 + $0x70] sm:$0x1]
    %v143 = vld [vmem:[%s127 + $0x78] sm:$0x1]
    %v144 = vld [vmem:[%s127 + $0x80] sm:$0x1]
    %v145 = vld [vmem:[%s127 + $0x88] sm:$0x1]
    %v146 = vld [vmem:[%s127 + $0x90] sm:$0x1]
    %v147 = vld [vmem:[%s127 + $0x98] sm:$0x1]
    %v148 = vld [vmem:[%s127 + $0xa0] sm:$0x1]
    %v149 = vld [vmem:[%s74] sm:$0xff]
    %v150 = vld [vmem:[%s74 + $0x8] sm:$0xff]
    %v151 = vld [vmem:[%s74 + $0x10] sm:$0xff]
    %v152 = vld [vmem:[%s74 + $0x18] sm:$0xff]
    %v153 = vld [vmem:[%s74 + $0x20] sm:$0xff]
    %v154 = vld [vmem:[%s74 + $0x28] sm:$0xff]
    %v155 = vld [vmem:[%s74 + $0x30] sm:$0xff]
    %v156 = vld [vmem:[%s74 + $0x38] sm:$0xff]
    %v157 = vld [vmem:[%s74 + $0x40] sm:$0xff]
    %v158 = vld [vmem:[%s74 + $0x48] sm:$0xff]
    %v159 = vld [vmem:[%s74 + $0x50] sm:$0xff]
    %v160 = vld [vmem:[%s74 + $0x58] sm:$0xff]
    %v161 = vld [vmem:[%s74 + $0x60] sm:$0xff]
    %v162 = vld [vmem:[%s74 + $0x68] sm:$0xff]
    %v163 = vld [vmem:[%s74 + $0x70] sm:$0x1]
    %v164 = vld [vmem:[%s74 + $0x78] sm:$0x1]
    %v165 = vld [vmem:[%s74 + $0x80] sm:$0x1]
    %v166 = vld [vmem:[%s74 + $0x88] sm:$0x1]
    %v167 = vld [vmem:[%s74 + $0x90] sm:$0x1]
    %v168 = vld [vmem:[%s74 + $0x98] sm:$0x1]
    %v169 = vld [vmem:[%s74 + $0xa0] sm:$0x1]
    %s170 = scalar_lea.vmem %s74, 168
    %v171 = vld [vmem:[%s170] sm:$0xff]
    %v172 = vld [vmem:[%s170 + $0x8] sm:$0xff]
    %v173 = vld [vmem:[%s170 + $0x10] sm:$0xff]
    %v174 = vld [vmem:[%s170 + $0x18] sm:$0xff]
    %v175 = vld [vmem:[%s170 + $0x20] sm:$0xff]
    %v176 = vld [vmem:[%s170 + $0x28] sm:$0xff]
    %v177 = vld [vmem:[%s170 + $0x30] sm:$0xff]
    %v178 = vld [vmem:[%s170 + $0x38] sm:$0xff]
    %v179 = vld [vmem:[%s170 + $0x40] sm:$0xff]
    %v180 = vld [vmem:[%s170 + $0x48] sm:$0xff]
    %v181 = vld [vmem:[%s170 + $0x50] sm:$0xff]
    %v182 = vld [vmem:[%s170 + $0x58] sm:$0xff]
    %v183 = vld [vmem:[%s170 + $0x60] sm:$0xff]
    %v184 = vld [vmem:[%s170 + $0x68] sm:$0xff]
    %v185 = vld [vmem:[%s170 + $0x70] sm:$0x1]
    %v186 = vld [vmem:[%s170 + $0x78] sm:$0x1]
    %v187 = vld [vmem:[%s170 + $0x80] sm:$0x1]
    %v188 = vld [vmem:[%s170 + $0x88] sm:$0x1]
    %v189 = vld [vmem:[%s170 + $0x90] sm:$0x1]
    %v190 = vld [vmem:[%s170 + $0x98] sm:$0x1]
    %v191 = vld [vmem:[%s170 + $0xa0] sm:$0x1]
    %v192 = vsub.f32 %v106, %v149
    %v193 = vsub.f32 %v107, %v150
    %v194 = vsub.f32 %v108, %v151
    %v195 = vsub.f32 %v109, %v152
    %v196 = vsub.f32 %v110, %v153
    %v197 = vsub.f32 %v111, %v154
    %v198 = vsub.f32 %v112, %v155
    %v199 = vsub.f32 %v113, %v156
    %v200 = vsub.f32 %v114, %v157
    %v201 = vsub.f32 %v115, %v158
    %v202 = vsub.f32 %v116, %v159
    %v203 = vsub.f32 %v117, %v160
    %v204 = vsub.f32 %v118, %v161
    %v205 = vsub.f32 %v119, %v162
    %v206 = vsub.f32 %v120, %v163
    %v207 = vsub.f32 %v121, %v164
    %v208 = vsub.f32 %v122, %v165
    %v209 = vsub.f32 %v123, %v166
    %v210 = vsub.f32 %v124, %v167
    %v211 = vsub.f32 %v125, %v168
    %v212 = vsub.f32 %v126, %v169
    %v213 = vand.u32 2147483647, %v192
    %v214 = vand.u32 2147483647, %v193
    %v215 = vand.u32 2147483647, %v194
    %v216 = vand.u32 2147483647, %v195
    %v217 = vand.u32 2147483647, %v196
    %v218 = vand.u32 2147483647, %v197
    %v219 = vand.u32 2147483647, %v198
    %v220 = vand.u32 2147483647, %v199
    %v221 = vand.u32 2147483647, %v200
    %v222 = vand.u32 2147483647, %v201
    %v223 = vand.u32 2147483647, %v202
    %v224 = vand.u32 2147483647, %v203
    %v225 = vand.u32 2147483647, %v204
    %v226 = vand.u32 2147483647, %v205
    %v227 = vand.u32 2147483647, %v206
    %v228 = vand.u32 2147483647, %v207
    %v229 = vand.u32 2147483647, %v208
    %v230 = vand.u32 2147483647, %v209
    %v231 = vand.u32 2147483647, %v210
    %v232 = vand.u32 2147483647, %v211
    %v233 = vand.u32 2147483647, %v212
    %v234 = vsub.f32 %v128, %v171
    %v235 = vsub.f32 %v129, %v172
    %v236 = vsub.f32 %v130, %v173
    %v237 = vsub.f32 %v131, %v174
    %v238 = vsub.f32 %v132, %v175
    %v239 = vsub.f32 %v133, %v176
    %v240 = vsub.f32 %v134, %v177
    %v241 = vsub.f32 %v135, %v178
    %v242 = vsub.f32 %v136, %v179
    %v243 = vsub.f32 %v137, %v180
    %v244 = vsub.f32 %v138, %v181
    %v245 = vsub.f32 %v139, %v182
    %v246 = vsub.f32 %v140, %v183
    %v247 = vsub.f32 %v141, %v184
    %v248 = vsub.f32 %v142, %v185
    %v249 = vsub.f32 %v143, %v186
    %v250 = vsub.f32 %v144, %v187
    %v251 = vsub.f32 %v145, %v188
    %v252 = vsub.f32 %v146, %v189
    %v253 = vsub.f32 %v147, %v190
    %v254 = vsub.f32 %v148, %v191
    %v255 = vand.u32 2147483647, %v234
    %v256 = vand.u32 2147483647, %v235
    %v257 = vand.u32 2147483647, %v236
    %v258 = vand.u32 2147483647, %v237
    %v259 = vand.u32 2147483647, %v238
    %v260 = vand.u32 2147483647, %v239
    %v261 = vand.u32 2147483647, %v240
    %v262 = vand.u32 2147483647, %v241
    %v263 = vand.u32 2147483647, %v242
    %v264 = vand.u32 2147483647, %v243
    %v265 = vand.u32 2147483647, %v244
    %v266 = vand.u32 2147483647, %v245
    %v267 = vand.u32 2147483647, %v246
    %v268 = vand.u32 2147483647, %v247
    %v269 = vand.u32 2147483647, %v248
    %v270 = vand.u32 2147483647, %v249
    %v271 = vand.u32 2147483647, %v250
    %v272 = vand.u32 2147483647, %v251
    %v273 = vand.u32 2147483647, %v252
    %v274 = vand.u32 2147483647, %v253
    %v275 = vand.u32 2147483647, %v254
    %v276 = vadd.f32 %v213, %v255
    %v277 = vadd.f32 %v214, %v256
    %v278 = vadd.f32 %v215, %v257
    %v279 = vadd.f32 %v216, %v258
    %v280 = vadd.f32 %v217, %v259
    %v281 = vadd.f32 %v218, %v260
    %v282 = vadd.f32 %v219, %v261
    %v283 = vadd.f32 %v220, %v262
    %v284 = vadd.f32 %v221, %v263
    %v285 = vadd.f32 %v222, %v264
    %v286 = vadd.f32 %v223, %v265
    %v287 = vadd.f32 %v224, %v266
    %v288 = vadd.f32 %v225, %v267
    %v289 = vadd.f32 %v226, %v268
    %v290 = vadd.f32 %v227, %v269
    %v291 = vadd.f32 %v228, %v270
    %v292 = vadd.f32 %v229, %v271
    %v293 = vadd.f32 %v230, %v272
    %v294 = vadd.f32 %v231, %v273
    %v295 = vadd.f32 %v232, %v274
    %v296 = vadd.f32 %v233, %v275
    %v297 = vld [vmem:[%s2] sm:$0xff]
    %v298 = vld [vmem:[%s2 + $0x8] sm:$0xff]
    %v299 = vld [vmem:[%s2 + $0x10] sm:$0x1]
    %301 = vset.pattern.permute.xlu0 0
    %302 = vperm.xlu0 %301, %v297
    %v303 = vpop.permute.xlu0 %302
    %306 = vset.pattern.permute.xlu0 0
    %307 = vperm.xlu0 %306, %v298
    %v308 = vpop.permute.xlu0 %307
    %311 = vset.pattern.permute.xlu0 0
    %312 = vperm.xlu0 %311, %v299
    %v313 = vpop.permute.xlu0 %312
    %vm315 = vcmp.gt.f32.partialorder %v276, %v303
    %vm316 = vcmp.gt.f32.partialorder %v277, %v303
    %vm317 = vcmp.gt.f32.partialorder %v278, %v303
    %vm318 = vcmp.gt.f32.partialorder %v279, %v303
    %vm319 = vcmp.gt.f32.partialorder %v280, %v303
    %vm320 = vcmp.gt.f32.partialorder %v281, %v303
    %vm321 = vcmp.gt.f32.partialorder %v282, %v303
    %vm322 = vcmp.gt.f32.partialorder %v283, %v308
    %vm323 = vcmp.gt.f32.partialorder %v284, %v308
    %vm324 = vcmp.gt.f32.partialorder %v285, %v308
    %vm325 = vcmp.gt.f32.partialorder %v286, %v308
    %vm326 = vcmp.gt.f32.partialorder %v287, %v308
    %vm327 = vcmp.gt.f32.partialorder %v288, %v308
    %vm328 = vcmp.gt.f32.partialorder %v289, %v308
    %vm329 = vcmp.gt.f32.partialorder %v290, %v313
    %vm330 = vcmp.gt.f32.partialorder %v291, %v313
    %vm331 = vcmp.gt.f32.partialorder %v292, %v313
    %vm332 = vcmp.gt.f32.partialorder %v293, %v313
    %vm333 = vcmp.gt.f32.partialorder %v294, %v313
    %vm334 = vcmp.gt.f32.partialorder %v295, %v313
    %vm335 = vcmp.gt.f32.partialorder %v296, %v313
    %v336 = vmul.f32 %v276, 0.001
    %v337 = vmul.f32 %v277, 0.001
    %v338 = vmul.f32 %v278, 0.001
    %v339 = vmul.f32 %v279, 0.001
    %v340 = vmul.f32 %v280, 0.001
    %v341 = vmul.f32 %v281, 0.001
    %v342 = vmul.f32 %v282, 0.001
    %v343 = vmul.f32 %v283, 0.001
    %v344 = vmul.f32 %v284, 0.001
    %v345 = vmul.f32 %v285, 0.001
    %v346 = vmul.f32 %v286, 0.001
    %v347 = vmul.f32 %v287, 0.001
    %v348 = vmul.f32 %v288, 0.001
    %v349 = vmul.f32 %v289, 0.001
    %v350 = vmul.f32 %v290, 0.001
    %v351 = vmul.f32 %v291, 0.001
    %v352 = vmul.f32 %v292, 0.001
    %v353 = vmul.f32 %v293, 0.001
    %v354 = vmul.f32 %v294, 0.001
    %v355 = vmul.f32 %v295, 0.001
    %v356 = vmul.f32 %v296, 0.001
    %v357 = vsel %vm315, %v276, %v336
    %v358 = vsel %vm316, %v277, %v337
    %v359 = vsel %vm317, %v278, %v338
    %v360 = vsel %vm318, %v279, %v339
    %v361 = vsel %vm319, %v280, %v340
    %v362 = vsel %vm320, %v281, %v341
    %v363 = vsel %vm321, %v282, %v342
    %v364 = vsel %vm322, %v283, %v343
    %v365 = vsel %vm323, %v284, %v344
    %v366 = vsel %vm324, %v285, %v345
    %v367 = vsel %vm325, %v286, %v346
    %v368 = vsel %vm326, %v287, %v347
    %v369 = vsel %vm327, %v288, %v348
    %v370 = vsel %vm328, %v289, %v349
    %v371 = vsel %vm329, %v290, %v350
    %v372 = vsel %vm330, %v291, %v351
    %v373 = vsel %vm331, %v292, %v352
    %v374 = vsel %vm332, %v293, %v353
    %v375 = vsel %vm333, %v294, %v354
    %v376 = vsel %vm334, %v295, %v355
    %v377 = vsel %vm335, %v296, %v356
    %s378 = sadd.s32 0, 0
    %v379 = vlaneseq
    %v380 = vand.u32 %v379, 127
    %v381 = vadd.s32 %v380, 128
    %v382 = vadd.s32 %v380, 256
    %v383 = vadd.s32 %v380, 384
    %v384 = vadd.s32 %v380, 512
    %v385 = vadd.s32 %v380, 640
    %v386 = vadd.s32 %v380, 768
    %s387 = smul.u32 %s378, 777
    %v388 = vstv %s387
    %v389 = vadd.s32 %v380, %v388
    %v390 = vadd.s32 %v381, %v388
    %v391 = vadd.s32 %v382, %v388
    %v392 = vadd.s32 %v383, %v388
    %v393 = vadd.s32 %v384, %v388
    %v394 = vadd.s32 %v385, %v388
    %v395 = vadd.s32 %v386, %v388
    %vm396 = vcmp.lt.s32.totalorder %v389, 777
    %vm397 = vcmp.lt.s32.totalorder %v390, 777
    %vm398 = vcmp.lt.s32.totalorder %v391, 777
    %vm399 = vcmp.lt.s32.totalorder %v392, 777
    %vm400 = vcmp.lt.s32.totalorder %v393, 777
    %vm401 = vcmp.lt.s32.totalorder %v394, 777
    %vm402 = vcmp.lt.s32.totalorder %v395, 777
    %v403 = vsel %vm396, %v357, 0.0
    %v404 = vsel %vm397, %v358, 0.0
    %v405 = vsel %vm398, %v359, 0.0
    %v406 = vsel %vm399, %v360, 0.0
    %v407 = vsel %vm400, %v361, 0.0
    %v408 = vsel %vm401, %v362, 0.0
    %v409 = vsel %vm402, %v363, 0.0
    %v410 = vsel %vm396, %v364, 0.0
    %v411 = vsel %vm397, %v365, 0.0
    %v412 = vsel %vm398, %v366, 0.0
    %v413 = vsel %vm399, %v367, 0.0
    %v414 = vsel %vm400, %v368, 0.0
    %v415 = vsel %vm401, %v369, 0.0
    %v416 = vsel %vm402, %v370, 0.0
    %v417 = vsel %vm396, %v371, 0.0
    %v418 = vsel %vm397, %v372, 0.0
    %v419 = vsel %vm398, %v373, 0.0
    %v420 = vsel %vm399, %v374, 0.0
    %v421 = vsel %vm400, %v375, 0.0
    %v422 = vsel %vm401, %v376, 0.0
    %v423 = vsel %vm402, %v377, 0.0
    %v424 = vld [vmem:[#allocation2] sm:$0xff]
    %v425 = vld [vmem:[#allocation2 + $0x8] sm:$0xff]
    %v426 = vld [vmem:[#allocation2 + $0x10] sm:$0xff]
    %v427 = vld [vmem:[#allocation2 + $0x18] sm:$0xff]
    %v428 = vld [vmem:[#allocation2 + $0x20] sm:$0xff]
    %v429 = vld [vmem:[#allocation2 + $0x28] sm:$0xff]
    %v430 = vld [vmem:[#allocation2 + $0x30] sm:$0xff]
    %v431 = vld [vmem:[#allocation2 + $0x38] sm:$0xff]
    %v432 = vld [vmem:[#allocation2 + $0x40] sm:$0xff]
    %v433 = vld [vmem:[#allocation2 + $0x48] sm:$0xff]
    %v434 = vld [vmem:[#allocation2 + $0x50] sm:$0xff]
    %v435 = vld [vmem:[#allocation2 + $0x58] sm:$0xff]
    %v436 = vld [vmem:[#allocation2 + $0x60] sm:$0xff]
    %v437 = vld [vmem:[#allocation2 + $0x68] sm:$0xff]
    %v438 = vld [vmem:[#allocation2 + $0x70] sm:$0x1]
    %v439 = vld [vmem:[#allocation2 + $0x78] sm:$0x1]
    %v440 = vld [vmem:[#allocation2 + $0x80] sm:$0x1]
    %v441 = vld [vmem:[#allocation2 + $0x88] sm:$0x1]
    %v442 = vld [vmem:[#allocation2 + $0x90] sm:$0x1]
    %v443 = vld [vmem:[#allocation2 + $0x98] sm:$0x1]
    %v444 = vld [vmem:[#allocation2 + $0xa0] sm:$0x1]
    %v445 = vadd.f32 %v424, %v403
    %v446 = vadd.f32 %v425, %v404
    %v447 = vadd.f32 %v426, %v405
    %v448 = vadd.f32 %v427, %v406
    %v449 = vadd.f32 %v428, %v407
    %v450 = vadd.f32 %v429, %v408
    %v451 = vadd.f32 %v430, %v409
    %v452 = vadd.f32 %v431, %v410
    %v453 = vadd.f32 %v432, %v411
    %v454 = vadd.f32 %v433, %v412
    %v455 = vadd.f32 %v434, %v413
    %v456 = vadd.f32 %v435, %v414
    %v457 = vadd.f32 %v436, %v415
    %v458 = vadd.f32 %v437, %v416
    %v459 = vadd.f32 %v438, %v417
    %v460 = vadd.f32 %v439, %v418
    %v461 = vadd.f32 %v440, %v419
    %v462 = vadd.f32 %v441, %v420
    %v463 = vadd.f32 %v442, %v421
    %v464 = vadd.f32 %v443, %v422
    %v465 = vadd.f32 %v444, %v423
    %466 = vst [vmem:[#allocation2] sm:$0xff] %v445
    %467 = vst [vmem:[#allocation2 + $0x8] sm:$0xff] %v446
    %468 = vst [vmem:[#allocation2 + $0x10] sm:$0xff] %v447
    %469 = vst [vmem:[#allocation2 + $0x18] sm:$0xff] %v448
    %470 = vst [vmem:[#allocation2 + $0x20] sm:$0xff] %v449
    %471 = vst [vmem:[#allocation2 + $0x28] sm:$0xff] %v450
    %vm472 = vcmask 72704
    %473 = vst.msk [vmem:[#allocation2 + $0x30] sm:$0xff] %vm472, %v451
    %474 = vst [vmem:[#allocation2 + $0x38] sm:$0xff] %v452
    %475 = vst [vmem:[#allocation2 + $0x40] sm:$0xff] %v453
    %476 = vst [vmem:[#allocation2 + $0x48] sm:$0xff] %v454
    %477 = vst [vmem:[#allocation2 + $0x50] sm:$0xff] %v455
    %478 = vst [vmem:[#allocation2 + $0x58] sm:$0xff] %v456
    %479 = vst [vmem:[#allocation2 + $0x60] sm:$0xff] %v457
    %480 = vst.msk [vmem:[#allocation2 + $0x68] sm:$0xff] %vm472, %v458
    %481 = vst [vmem:[#allocation2 + $0x70] sm:$0x1] %v459
    %482 = vst [vmem:[#allocation2 + $0x78] sm:$0x1] %v460
    %483 = vst [vmem:[#allocation2 + $0x80] sm:$0x1] %v461
    %484 = vst [vmem:[#allocation2 + $0x88] sm:$0x1] %v462
    %485 = vst [vmem:[#allocation2 + $0x90] sm:$0x1] %v463
    %486 = vst [vmem:[#allocation2 + $0x98] sm:$0x1] %v464
    %vm487 = vcmask 65536
    %488 = vst.msk [vmem:[#allocation2 + $0xa0] sm:$0x1] %vm487, %v465
    // Predicated region
    $region18: #{tpu_custom_call.1} parent=1 // pred_check
      %p489 = pneg %p79
    $region19: #{tpu_custom_call.1} parent=1 // pred_check_branch
      %491 = sbr.rel (%p489) target = $region21
    $region20: #{tpu_custom_call.1} parent=1 // pred_region
      %v492 = vld [vmem:[#allocation2] sm:$0xff]
      %v493 = vld [vmem:[#allocation2 + $0x8] sm:$0xff]
      %v494 = vld [vmem:[#allocation2 + $0x10] sm:$0xff]
      %v495 = vld [vmem:[#allocation2 + $0x18] sm:$0xff]
      %v496 = vld [vmem:[#allocation2 + $0x20] sm:$0xff]
      %v497 = vld [vmem:[#allocation2 + $0x28] sm:$0xff]
      %v498 = vld [vmem:[#allocation2 + $0x30] sm:$0xff]
      %v499 = vld [vmem:[#allocation2 + $0x38] sm:$0xff]
      %v500 = vld [vmem:[#allocation2 + $0x40] sm:$0xff]
      %v501 = vld [vmem:[#allocation2 + $0x48] sm:$0xff]
      %v502 = vld [vmem:[#allocation2 + $0x50] sm:$0xff]
      %v503 = vld [vmem:[#allocation2 + $0x58] sm:$0xff]
      %v504 = vld [vmem:[#allocation2 + $0x60] sm:$0xff]
      %v505 = vld [vmem:[#allocation2 + $0x68] sm:$0xff]
      %v506 = vld [vmem:[#allocation2 + $0x70] sm:$0x1]
      %v507 = vld [vmem:[#allocation2 + $0x78] sm:$0x1]
      %v508 = vld [vmem:[#allocation2 + $0x80] sm:$0x1]
      %v509 = vld [vmem:[#allocation2 + $0x88] sm:$0x1]
      %v510 = vld [vmem:[#allocation2 + $0x90] sm:$0x1]
      %v511 = vld [vmem:[#allocation2 + $0x98] sm:$0x1]
      %v512 = vld [vmem:[#allocation2 + $0xa0] sm:$0x1]
      %v513 = vadd.f32 %v492, %v493
      %v514 = vadd.f32 %v513, %v494
      %v515 = vadd.f32 %v514, %v495
      %v516 = vadd.f32 %v515, %v496
      %v517 = vadd.f32 %v516, %v497
      %v518 = vsel %vm472, %v498, 0.0
      %v519 = vadd.f32 %v517, %v518
      %v520 = vadd.f32 %v519, %v499
      %v521 = vadd.f32 %v520, %v500
      %v522 = vadd.f32 %v521, %v501
      %v523 = vadd.f32 %v522, %v502
      %v524 = vadd.f32 %v523, %v503
      %v525 = vadd.f32 %v524, %v504
      %v526 = vsel %vm472, %v505, 0.0
      %v527 = vadd.f32 %v525, %v526
      %vm528 = vcmask 1040384
      %v529 = vsel %vm528, %v506, 0.0
      %v530 = vadd.f32 %v527, %v529
      %v531 = vsel %vm528, %v507, 0.0
      %v532 = vadd.f32 %v530, %v531
      %v533 = vsel %vm528, %v508, 0.0
      %v534 = vadd.f32 %v532, %v533
      %v535 = vsel %vm528, %v509, 0.0
      %v536 = vadd.f32 %v534, %v535
      %v537 = vsel %vm528, %v510, 0.0
      %v538 = vadd.f32 %v536, %v537
      %v539 = vsel %vm528, %v511, 0.0
      %v540 = vadd.f32 %v538, %v539
      %v541 = vsel %vm487, %v512, 0.0
      %v542 = vadd.f32 %v540, %v541
      %543 = vadd.xlane.f32.xlu0 %v542
      %v544 = vpop.xlane.xlu0 %543
      %v545 = vrot.slane %v544, 4
      %v546 = vadd.f32 %v544, %v545
      %v547 = vrot.slane %v546, 2
      %v548 = vadd.f32 %v546, %v547
      %v549 = vrot.slane %v548, 1
      %v550 = vadd.f32 %v548, %v549
      %s551 = vtos %v550
      %s552 = smul.f32 %s551, 7.570596e-05
      %v553 = vstv %s552
      %554 = vst [vmem:[#allocation3] sm:$0xff] %v553
    $region21: #{tpu_custom_call.1} parent=1 // pred_fallthru
      _
    // Predicated region
    $region22: #{tpu_custom_call.1} parent=1 // pred_check
      _
    $region23: #{tpu_custom_call.1} parent=1 // pred_check_branch
      %556 = sbr.rel (0) target = $region25
    $region24: #{tpu_custom_call.1} parent=1 // pred_region
      %s558 = ssub.s32 128, 128
      %559 = vsyncadd [#allocation4], %s558
      %s561 = sshll.u32 [#allocation3], 4
      %s562 = int_to_ptr.vmem [resolvable:$true] %s561
      %564 = dma.vmem_to_hbm [thread:$0]  %s562, 128, %s3, [#allocation4]
    $region25: #{tpu_custom_call.1} parent=1 // pred_fallthru
      _
    // Predicated region
    $region26: #{tpu_custom_call.1} parent=1 // pred_check
      _
    $region27: #{tpu_custom_call.1} parent=1 // pred_check_branch
      %566 = sbr.rel (0) target = $region29
    $region28: #{tpu_custom_call.1} parent=1 // pred_region
      %567 = dma.done [#allocation4], 128
    $region29: #{tpu_custom_call.1} parent=1 // pred_fallthru
      _
    %568 = vsyncpa [#allocation4], 1

</llo_original>
